<compile_context>
chip_gen: v7x
topology: tpu7x:2x2x1
jax: 0.10.0
libtpu: 0.0.40
codegen_flags: <defaults>
</compile_context>

<pallas_src>
import jax
import jax.numpy as jnp
from jax.experimental import pallas as pl
from jax.experimental.pallas import tpu as pltpu

EPS = 1e-5


def _pick_tile(hw):
    """Largest lane-dense tile (multiple of 128) that divides H*W, capped at 2048."""
    for tn in (2048, 1024, 512, 256, 128):
        if hw % tn == 0:
            return tn
    return hw  # small / ragged spatial sizes: one full-extent block


def _cmatmul(w, x):
    """(Co, Ci) @ (Ci, N) -> (Co, N).

    For the tiny channel counts of this module the MXU would run a degenerate
    K<=8 matmul, so we do Ci VPU broadcast-FMAs instead (each channel row of x
    is a lane-dense slab).  Larger channel counts use the MXU.
    """
    co, ci = w.shape
    if ci <= 8:
        acc = w[:, 0:1] * x[0:1, :]
        for k in range(1, ci):
            acc = acc + w[:, k:k + 1] * x[k:k + 1, :]
        return acc
    return jnp.dot(w, x, preferred_element_type=jnp.float32)


def _attention_fusion_kernel(x1_ref, x2_ref,
                             wa_ref, ba_ref, wc1_ref, wc2_ref, bc_ref,
                             o_ref):
    # x1_ref / x2_ref : (1, Cin, tn)   spatial-on-lanes slabs
    x1 = x1_ref[0].astype(jnp.float32)          # (Cin, tn)
    x2 = x2_ref[0].astype(jnp.float32)          # (Cin, tn)

    wa = wa_ref[...].astype(jnp.float32)        # (Cin, Cin)  gate conv, BN folded
    ba = ba_ref[...].astype(jnp.float32)        # (Cin, 1)
    wc1 = wc1_ref[...].astype(jnp.float32)      # (Cout, Cin) fusion conv, x1 block
    wc2 = wc2_ref[...].astype(jnp.float32)      # (Cout, Cin) fusion conv, gated block
    bc = bc_ref[...].astype(jnp.float32)        # (Cout, 1)

    # attention_gate(x2) = sigmoid(BN(conv1x1(x2)))   (BN folded into wa/ba)
    gate = jax.nn.sigmoid(_cmatmul(wa, x2) + ba)        # (Cin, tn)

    # x_attention = gate * x1
    xg = gate * x1                                      # (Cin, tn)

    # conv1x1(cat([x1, x_attention]))  ==  Wc1 @ x1 + Wc2 @ x_attention + bc
    out = _cmatmul(wc1, x1) + _cmatmul(wc2, xg) + bc    # (Cout, tn)

    o_ref[0] = out.astype(o_ref.dtype)


def attention_fusion_xr_pallas(x1, x2, params):
    """x1, x2: (B, Cin, H, W) NCHW (PyTorch layout).  Returns (B, Cout, H, W)."""
    B, Cin, H, W = x1.shape
    Cout = params["wc"].shape[0]
    HW = H * W
    tn = _pick_tile(HW)

    # NCHW is already channels-on-sublanes / spatial-on-lanes after a free reshape.
    x1f = x1.reshape(B, Cin, HW)
    x2f = x2.reshape(B, Cin, HW)

    # Fold BatchNorm (inference) into the gate conv.
    scale = params["bn_gamma"] / jnp.sqrt(params["bn_var"] + EPS)
    shift = params["bn_beta"] - params["bn_mean"] * scale
    wa = (params["wg"] * scale[:, None]).astype(jnp.float32)          # (Cin, Cin)
    ba = (params["bg"] * scale + shift)[:, None].astype(jnp.float32)  # (Cin, 1)

    # Split the fusion conv along its input channels to avoid the concat.
    wc = params["wc"].astype(jnp.float32)        # (Cout, 2*Cin)
    wc1 = wc[:, :Cin]                            # hits x1
    wc2 = wc[:, Cin:]                            # hits x_attention
    bc = params["bc"][:, None].astype(jnp.float32)

    grid = (B, HW // tn)
    out = pl.pallas_call(
        _attention_fusion_kernel,
        out_shape=jax.ShapeDtypeStruct((B, Cout, HW), x1.dtype),
        grid=grid,
        in_specs=[
            pl.BlockSpec((1, Cin, tn), lambda b, j: (b, 0, j)),
            pl.BlockSpec((1, Cin, tn), lambda b, j: (b, 0, j)),
            pl.BlockSpec((Cin, Cin), lambda b, j: (0, 0)),
            pl.BlockSpec((Cin, 1), lambda b, j: (0, 0)),
            pl.BlockSpec((Cout, Cin), lambda b, j: (0, 0)),
            pl.BlockSpec((Cout, Cin), lambda b, j: (0, 0)),
            pl.BlockSpec((Cout, 1), lambda b, j: (0, 0)),
        ],
        out_specs=pl.BlockSpec((1, Cout, tn), lambda b, j: (b, 0, j)),
        compiler_params=pltpu.CompilerParams(
            dimension_semantics=("parallel", "parallel")),
    )(x1f, x2f, wa, ba, wc1, wc2, bc)
    return out.reshape(B, Cout, H, W)


# ----------------------------------------------------------------------------
# Pure-JAX reference (mirrors the PyTorch module, inference-mode BN).
# ----------------------------------------------------------------------------
def attention_fusion_xr_ref(x1, x2, p):
    scale = p["bn_gamma"] / jnp.sqrt(p["bn_var"] + EPS)
    shift = p["bn_beta"] - p["bn_mean"] * scale
    g = jnp.einsum("oi,bihw->bohw", p["wg"], x2) + p["bg"][None, :, None, None]
    g = g * scale[None, :, None, None] + shift[None, :, None, None]
    g = jax.nn.sigmoid(g)
    x_att = g * x1
    cat = jnp.concatenate([x1, x_att], axis=1)
    return (jnp.einsum("oi,bihw->bohw", p["wc"], cat)
            + p["bc"][None, :, None, None])


def init_params(key, in_channels, out_channels):
    ks = jax.random.split(key, 8)
    p = {}
    p["wg"] = 0.1 * jax.random.normal(ks[0], (in_channels, in_channels), jnp.float32)
    p["bg"] = 0.1 * jax.random.normal(ks[1], (in_channels,), jnp.float32)
    p["bn_gamma"] = 1.0 + 0.1 * jax.random.normal(ks[2], (in_channels,), jnp.float32)
    p["bn_beta"] = 0.1 * jax.random.normal(ks[3], (in_channels,), jnp.float32)
    p["bn_mean"] = 0.1 * jax.random.normal(ks[4], (in_channels,), jnp.float32)
    p["bn_var"] = 0.5 + jax.random.uniform(ks[5], (in_channels,), jnp.float32)
    p["wc"] = 0.1 * jax.random.normal(ks[6], (out_channels, 2 * in_channels), jnp.float32)
    p["bc"] = 0.1 * jax.random.normal(ks[7], (out_channels,), jnp.float32)
    return p


if __name__ == "__main__":
    key = jax.random.PRNGKey(0)
    in_channels, out_channels = 4, 4
    B, H, W = 2, 16, 16

    k1, k2, kp = jax.random.split(key, 3)
    x1 = jax.random.normal(k1, (B, in_channels, H, W), jnp.float32)   # NCHW
    x2 = jax.random.normal(k2, (B, in_channels, H, W), jnp.float32)   # NCHW
    params = init_params(kp, in_channels, out_channels)

    out = attention_fusion_xr_pallas(x1, x2, params)
    out = jax.block_until_ready(out)
    assert out.shape == (B, out_channels, H, W), out.shape
    assert bool(jnp.all(jnp.isfinite(out)))

    ref = attention_fusion_xr_ref(x1, x2, params)
    max_err = float(jnp.max(jnp.abs(out - ref)))
    assert max_err < 1e-4, f"mismatch vs reference: {max_err}"

    print("KERNEL_OK")
</pallas_src>

<mosaic_0001>
module attributes {stable_mosaic.version = 11 : i64} {
  func.func @_attention_fusion_kernel(%arg0: i32, %arg1: i32, %arg2: memref<1x4x256xf32, #tpu.memory_space<vmem>>, %arg3: memref<1x4x256xf32, #tpu.memory_space<vmem>>, %arg4: memref<4x4xf32, #tpu.memory_space<vmem>>, %arg5: memref<4x1xf32, #tpu.memory_space<vmem>>, %arg6: memref<4x4xf32, #tpu.memory_space<vmem>>, %arg7: memref<4x4xf32, #tpu.memory_space<vmem>>, %arg8: memref<4x1xf32, #tpu.memory_space<vmem>>, %arg9: memref<1x4x256xf32, #tpu.memory_space<vmem>>) attributes {dimension_semantics = [#tpu.dimension_semantics<parallel>, #tpu.dimension_semantics<parallel>], iteration_bounds = array<i64: 2, 1>, scalar_prefetch = 0 : i64, scratch_operands = 0 : i64, tpu.core_type = #tpu.core_type<tc>, window_params = [{transform_indices = @transform_0, window_bounds = array<i64: 1, 4, 256>}, {transform_indices = @transform_1, window_bounds = array<i64: 1, 4, 256>}, {pipeline_mode = #tpu.pipeline_mode<synchronous>, transform_indices = @transform_2, window_bounds = array<i64: 4, 4>}, {pipeline_mode = #tpu.pipeline_mode<synchronous>, transform_indices = @transform_3, window_bounds = array<i64: 4, 1>}, {pipeline_mode = #tpu.pipeline_mode<synchronous>, transform_indices = @transform_4, window_bounds = array<i64: 4, 4>}, {pipeline_mode = #tpu.pipeline_mode<synchronous>, transform_indices = @transform_5, window_bounds = array<i64: 4, 4>}, {pipeline_mode = #tpu.pipeline_mode<synchronous>, transform_indices = @transform_6, window_bounds = array<i64: 4, 1>}, {transform_indices = @transform_7, window_bounds = array<i64: 1, 4, 256>}]} {
    %c0 = arith.constant 0 : index
    %c0_0 = arith.constant 0 : index
    %c0_1 = arith.constant 0 : index
    %0 = vector.load %arg2[%c0, %c0_0, %c0_1] : memref<1x4x256xf32, #tpu.memory_space<vmem>>, vector<1x4x256xf32>
    %1 = vector.shape_cast %0 : vector<1x4x256xf32> to vector<4x256xf32>
    %c0_2 = arith.constant 0 : index
    %c0_3 = arith.constant 0 : index
    %c0_4 = arith.constant 0 : index
    %2 = vector.load %arg3[%c0_2, %c0_3, %c0_4] : memref<1x4x256xf32, #tpu.memory_space<vmem>>, vector<1x4x256xf32>
    %3 = vector.shape_cast %2 : vector<1x4x256xf32> to vector<4x256xf32>
    %c0_5 = arith.constant 0 : index
    %c0_6 = arith.constant 0 : index
    %4 = vector.load %arg4[%c0_5, %c0_6] : memref<4x4xf32, #tpu.memory_space<vmem>>, vector<4x4xf32>
    %c0_7 = arith.constant 0 : index
    %c0_8 = arith.constant 0 : index
    %5 = vector.load %arg5[%c0_7, %c0_8] : memref<4x1xf32, #tpu.memory_space<vmem>>, vector<4x1xf32>
    %c0_9 = arith.constant 0 : index
    %c0_10 = arith.constant 0 : index
    %6 = vector.load %arg6[%c0_9, %c0_10] : memref<4x4xf32, #tpu.memory_space<vmem>>, vector<4x4xf32>
    %c0_11 = arith.constant 0 : index
    %c0_12 = arith.constant 0 : index
    %7 = vector.load %arg7[%c0_11, %c0_12] : memref<4x4xf32, #tpu.memory_space<vmem>>, vector<4x4xf32>
    %c0_13 = arith.constant 0 : index
    %c0_14 = arith.constant 0 : index
    %8 = vector.load %arg8[%c0_13, %c0_14] : memref<4x1xf32, #tpu.memory_space<vmem>>, vector<4x1xf32>
    %9 = vector.extract_strided_slice %4 {offsets = [0, 0], sizes = [4, 1], strides = [1, 1]} : vector<4x4xf32> to vector<4x1xf32>
    %10 = vector.extract_strided_slice %3 {offsets = [0, 0], sizes = [1, 256], strides = [1, 1]} : vector<4x256xf32> to vector<1x256xf32>
    %11 = vector.broadcast %9 : vector<4x1xf32> to vector<4x256xf32>
    %12 = vector.broadcast %10 : vector<1x256xf32> to vector<4x256xf32>
    %13 = arith.mulf %11, %12 : vector<4x256xf32>
    %14 = vector.extract_strided_slice %4 {offsets = [0, 1], sizes = [4, 1], strides = [1, 1]} : vector<4x4xf32> to vector<4x1xf32>
    %15 = vector.extract_strided_slice %3 {offsets = [1, 0], sizes = [1, 256], strides = [1, 1]} : vector<4x256xf32> to vector<1x256xf32>
    %16 = vector.broadcast %14 : vector<4x1xf32> to vector<4x256xf32>
    %17 = vector.broadcast %15 : vector<1x256xf32> to vector<4x256xf32>
    %18 = arith.mulf %16, %17 : vector<4x256xf32>
    %19 = arith.addf %13, %18 : vector<4x256xf32>
    %20 = vector.extract_strided_slice %4 {offsets = [0, 2], sizes = [4, 1], strides = [1, 1]} : vector<4x4xf32> to vector<4x1xf32>
    %21 = vector.extract_strided_slice %3 {offsets = [2, 0], sizes = [1, 256], strides = [1, 1]} : vector<4x256xf32> to vector<1x256xf32>
    %22 = vector.broadcast %20 : vector<4x1xf32> to vector<4x256xf32>
    %23 = vector.broadcast %21 : vector<1x256xf32> to vector<4x256xf32>
    %24 = arith.mulf %22, %23 : vector<4x256xf32>
    %25 = arith.addf %19, %24 : vector<4x256xf32>
    %26 = vector.extract_strided_slice %4 {offsets = [0, 3], sizes = [4, 1], strides = [1, 1]} : vector<4x4xf32> to vector<4x1xf32>
    %27 = vector.extract_strided_slice %3 {offsets = [3, 0], sizes = [1, 256], strides = [1, 1]} : vector<4x256xf32> to vector<1x256xf32>
    %28 = vector.broadcast %26 : vector<4x1xf32> to vector<4x256xf32>
    %29 = vector.broadcast %27 : vector<1x256xf32> to vector<4x256xf32>
    %30 = arith.mulf %28, %29 : vector<4x256xf32>
    %31 = arith.addf %25, %30 : vector<4x256xf32>
    %32 = vector.broadcast %5 : vector<4x1xf32> to vector<4x256xf32>
    %33 = arith.addf %31, %32 : vector<4x256xf32>
    %34 = arith.negf %33 : vector<4x256xf32>
    %35 = math.exp %34 : vector<4x256xf32>
    %cst = arith.constant 1.000000e+00 : f32
    %36 = vector.broadcast %cst : f32 to vector<4x256xf32>
    %37 = arith.addf %36, %35 : vector<4x256xf32>
    %38 = arith.divf %36, %37 : vector<4x256xf32>
    %39 = arith.mulf %38, %1 : vector<4x256xf32>
    %40 = vector.extract_strided_slice %6 {offsets = [0, 0], sizes = [4, 1], strides = [1, 1]} : vector<4x4xf32> to vector<4x1xf32>
    %41 = vector.extract_strided_slice %1 {offsets = [0, 0], sizes = [1, 256], strides = [1, 1]} : vector<4x256xf32> to vector<1x256xf32>
    %42 = vector.broadcast %40 : vector<4x1xf32> to vector<4x256xf32>
    %43 = vector.broadcast %41 : vector<1x256xf32> to vector<4x256xf32>
    %44 = arith.mulf %42, %43 : vector<4x256xf32>
    %45 = vector.extract_strided_slice %6 {offsets = [0, 1], sizes = [4, 1], strides = [1, 1]} : vector<4x4xf32> to vector<4x1xf32>
    %46 = vector.extract_strided_slice %1 {offsets = [1, 0], sizes = [1, 256], strides = [1, 1]} : vector<4x256xf32> to vector<1x256xf32>
    %47 = vector.broadcast %45 : vector<4x1xf32> to vector<4x256xf32>
    %48 = vector.broadcast %46 : vector<1x256xf32> to vector<4x256xf32>
    %49 = arith.mulf %47, %48 : vector<4x256xf32>
    %50 = arith.addf %44, %49 : vector<4x256xf32>
    %51 = vector.extract_strided_slice %6 {offsets = [0, 2], sizes = [4, 1], strides = [1, 1]} : vector<4x4xf32> to vector<4x1xf32>
    %52 = vector.extract_strided_slice %1 {offsets = [2, 0], sizes = [1, 256], strides = [1, 1]} : vector<4x256xf32> to vector<1x256xf32>
    %53 = vector.broadcast %51 : vector<4x1xf32> to vector<4x256xf32>
    %54 = vector.broadcast %52 : vector<1x256xf32> to vector<4x256xf32>
    %55 = arith.mulf %53, %54 : vector<4x256xf32>
    %56 = arith.addf %50, %55 : vector<4x256xf32>
    %57 = vector.extract_strided_slice %6 {offsets = [0, 3], sizes = [4, 1], strides = [1, 1]} : vector<4x4xf32> to vector<4x1xf32>
    %58 = vector.extract_strided_slice %1 {offsets = [3, 0], sizes = [1, 256], strides = [1, 1]} : vector<4x256xf32> to vector<1x256xf32>
    %59 = vector.broadcast %57 : vector<4x1xf32> to vector<4x256xf32>
    %60 = vector.broadcast %58 : vector<1x256xf32> to vector<4x256xf32>
    %61 = arith.mulf %59, %60 : vector<4x256xf32>
    %62 = arith.addf %56, %61 : vector<4x256xf32>
    %63 = vector.extract_strided_slice %7 {offsets = [0, 0], sizes = [4, 1], strides = [1, 1]} : vector<4x4xf32> to vector<4x1xf32>
    %64 = vector.extract_strided_slice %39 {offsets = [0, 0], sizes = [1, 256], strides = [1, 1]} : vector<4x256xf32> to vector<1x256xf32>
    %65 = vector.broadcast %63 : vector<4x1xf32> to vector<4x256xf32>
    %66 = vector.broadcast %64 : vector<1x256xf32> to vector<4x256xf32>
    %67 = arith.mulf %65, %66 : vector<4x256xf32>
    %68 = vector.extract_strided_slice %7 {offsets = [0, 1], sizes = [4, 1], strides = [1, 1]} : vector<4x4xf32> to vector<4x1xf32>
    %69 = vector.extract_strided_slice %39 {offsets = [1, 0], sizes = [1, 256], strides = [1, 1]} : vector<4x256xf32> to vector<1x256xf32>
    %70 = vector.broadcast %68 : vector<4x1xf32> to vector<4x256xf32>
    %71 = vector.broadcast %69 : vector<1x256xf32> to vector<4x256xf32>
    %72 = arith.mulf %70, %71 : vector<4x256xf32>
    %73 = arith.addf %67, %72 : vector<4x256xf32>
    %74 = vector.extract_strided_slice %7 {offsets = [0, 2], sizes = [4, 1], strides = [1, 1]} : vector<4x4xf32> to vector<4x1xf32>
    %75 = vector.extract_strided_slice %39 {offsets = [2, 0], sizes = [1, 256], strides = [1, 1]} : vector<4x256xf32> to vector<1x256xf32>
    %76 = vector.broadcast %74 : vector<4x1xf32> to vector<4x256xf32>
    %77 = vector.broadcast %75 : vector<1x256xf32> to vector<4x256xf32>
    %78 = arith.mulf %76, %77 : vector<4x256xf32>
    %79 = arith.addf %73, %78 : vector<4x256xf32>
    %80 = vector.extract_strided_slice %7 {offsets = [0, 3], sizes = [4, 1], strides = [1, 1]} : vector<4x4xf32> to vector<4x1xf32>
    %81 = vector.extract_strided_slice %39 {offsets = [3, 0], sizes = [1, 256], strides = [1, 1]} : vector<4x256xf32> to vector<1x256xf32>
    %82 = vector.broadcast %80 : vector<4x1xf32> to vector<4x256xf32>
    %83 = vector.broadcast %81 : vector<1x256xf32> to vector<4x256xf32>
    %84 = arith.mulf %82, %83 : vector<4x256xf32>
    %85 = arith.addf %79, %84 : vector<4x256xf32>
    %86 = arith.addf %62, %85 : vector<4x256xf32>
    %87 = vector.broadcast %8 : vector<4x1xf32> to vector<4x256xf32>
    %88 = arith.addf %86, %87 : vector<4x256xf32>
    %c0_15 = arith.constant 0 : index
    %c0_16 = arith.constant 0 : index
    %c0_17 = arith.constant 0 : index
    %89 = vector.load %arg9[%c0_15, %c0_16, %c0_17] : memref<1x4x256xf32, #tpu.memory_space<vmem>>, vector<1x4x256xf32>
    %90 = vector.shape_cast %89 : vector<1x4x256xf32> to vector<4x256xf32>
    %91 = vector.shape_cast %88 : vector<4x256xf32> to vector<1x4x256xf32>
    tpu.vector_store %arg9[%c0_15, %c0_16, %c0_17], %91 {strides = array<i32>} : memref<1x4x256xf32, #tpu.memory_space<vmem>>, vector<1x4x256xf32>,
    return
  }
  func.func @transform_0(%arg0: i32, %arg1: i32) -> (i32, i32, i32) {
    %c0_i32 = arith.constant 0 : i32
    %c0_i32_0 = arith.constant 0 : i32
    return %arg0, %c0_i32, %arg1 : i32, i32, i32
  }
  func.func @transform_1(%arg0: i32, %arg1: i32) -> (i32, i32, i32) {
    %c0_i32 = arith.constant 0 : i32
    %c0_i32_0 = arith.constant 0 : i32
    return %arg0, %c0_i32, %arg1 : i32, i32, i32
  }
  func.func @transform_2(%arg0: i32, %arg1: i32) -> (i32, i32) {
    %c0_i32 = arith.constant 0 : i32
    %c0_i32_0 = arith.constant 0 : i32
    %c0_i32_1 = arith.constant 0 : i32
    return %c0_i32, %c0_i32_0 : i32, i32
  }
  func.func @transform_3(%arg0: i32, %arg1: i32) -> (i32, i32) {
    %c0_i32 = arith.constant 0 : i32
    %c0_i32_0 = arith.constant 0 : i32
    %c0_i32_1 = arith.constant 0 : i32
    return %c0_i32, %c0_i32_0 : i32, i32
  }
  func.func @transform_4(%arg0: i32, %arg1: i32) -> (i32, i32) {
    %c0_i32 = arith.constant 0 : i32
    %c0_i32_0 = arith.constant 0 : i32
    %c0_i32_1 = arith.constant 0 : i32
    return %c0_i32, %c0_i32_0 : i32, i32
  }
  func.func @transform_5(%arg0: i32, %arg1: i32) -> (i32, i32) {
    %c0_i32 = arith.constant 0 : i32
    %c0_i32_0 = arith.constant 0 : i32
    %c0_i32_1 = arith.constant 0 : i32
    return %c0_i32, %c0_i32_0 : i32, i32
  }
  func.func @transform_6(%arg0: i32, %arg1: i32) -> (i32, i32) {
    %c0_i32 = arith.constant 0 : i32
    %c0_i32_0 = arith.constant 0 : i32
    %c0_i32_1 = arith.constant 0 : i32
    return %c0_i32, %c0_i32_0 : i32, i32
  }
  func.func @transform_7(%arg0: i32, %arg1: i32) -> (i32, i32, i32) {
    %c0_i32 = arith.constant 0 : i32
    %c0_i32_0 = arith.constant 0 : i32
    return %arg0, %c0_i32, %arg1 : i32, i32, i32
  }
}

</mosaic_0001>

<llo_original>
// kernel: tpu_custom_call.1
$region0: #{tpu_custom_call.1}
  #allocation0 [shape = 'u32[]', space=smem, size = 0x4, offset = 0x4, fixed_abs, tag = 'smem constant byte address 0x4 - core index']
  #allocation1 [shape = 'u32[144,128]{1,0:T(1,128)}', space=vmem, size = 0x12000, scoped, tag = 'internal scratch']
  %s0 = inlined_call_operand.hbm [shape: f32[2,4,256], index: 0, kind: input, shape index: {}]
  %s1 = inlined_call_operand.hbm [shape: f32[2,4,256], index: 1, kind: input, shape index: {}]
  %s2 = inlined_call_operand.vmem [shape: f32[4,4], index: 2, kind: input, shape index: {}]
  %s3 = inlined_call_operand.vmem [shape: f32[4,1], index: 3, kind: input, shape index: {}]
  %s4 = inlined_call_operand.vmem [shape: f32[4,4], index: 4, kind: input, shape index: {}]
  %s5 = inlined_call_operand.vmem [shape: f32[4,4], index: 5, kind: input, shape index: {}]
  %s6 = inlined_call_operand.vmem [shape: f32[4,1], index: 6, kind: input, shape index: {}]
  %s7 = inlined_call_operand.hbm [shape: f32[2,4,256], index: 7, kind: output, shape index: {}]
  %s8 = sld [smem:[#allocation0]]
  $region69: #{tpu_custom_call.1} parent=0
    _
  %s10 = ssub.s32 1, %s8
  %s11 = scalar_select 0, %s10, %s8
  $region1: #{tpu_custom_call.1} parent=0
    #allocation2 [shape = 'u8[8192]{0}', space=vmem, size = 0x2000, scoped, tag = 'input window, operand 0']
    #allocation3 [shape = 's32[2]{0}', space=sflag, size = 0x8, scoped, tag = 'scoped memory for tpu_custom_call.1']
    #allocation4 [shape = 's32[2]{0}', space=sflag, size = 0x8, scoped, tag = 'scoped memory for tpu_custom_call.1']
    #allocation5 [shape = 'u8[8192]{0}', space=vmem, size = 0x2000, scoped, tag = 'input window, operand 1']
    #allocation6 [shape = 's32[2]{0}', space=sflag, size = 0x8, scoped, tag = 'scoped memory for tpu_custom_call.1']
    #allocation7 [shape = 'u8[8192]{0}', space=vmem, size = 0x2000, scoped, tag = 'output window, operand 0']
    %12 = vsyncpa [#allocation3], 0
    %s13 = scalar_lea.sflag [#allocation3], 1
    %14 = vsyncpa %s13, 0
    %15 = vsyncpa [#allocation6], 0
    %s16 = scalar_lea.sflag [#allocation6], 1
    %17 = vsyncpa %s16, 0
    %18 = vsyncpa [#allocation4], 0
    %s19 = scalar_lea.sflag [#allocation4], 1
    %20 = vsyncpa %s19, 0
    loop: start=0, step=1, limit=4
    $region2: #{tpu_custom_call.1} parent=1 // loop_pre_header
      _
    $region3: #{tpu_custom_call.1} parent=1 // loop_header
      %s22 = sphi 0, %s26
      %p23 = scmp.ge.s32.totalorder %s22, 4
      %s29 = sphi 0, %s41
      %s30 = sphi 0, %s37
      %s31 = sphi 0, %s29
      %s32 = sphi 0, %s30
      %s33 = sphi 0, %s31
      %s34 = sphi 0, %s32
      %s46 = sphi 0, %s48
      %s49 = sphi 0, %s46
      %s50 = sphi 0, %s49
      %s66 = sphi 0, %s50
      %s74 = sphi 0, %s76
      %s77 = sphi 0, %s74
      %s78 = sphi 0, %s77
      %s94 = sphi 0, %s78
      %s98 = sphi 0, %s98
      %s100 = sphi 0, %s98
      %s101 = sphi 0, %s100
      %s115 = sphi 0, %s101
      %s119 = sphi 0, %s119
      %s121 = sphi 0, %s119
      %s122 = sphi 0, %s121
      %s136 = sphi 0, %s122
      %s140 = sphi 0, %s140
      %s142 = sphi 0, %s140
      %s143 = sphi 0, %s142
      %s157 = sphi 0, %s143
      %s161 = sphi 0, %s161
      %s163 = sphi 0, %s161
      %s164 = sphi 0, %s163
      %s178 = sphi 0, %s164
      %s182 = sphi 0, %s182
      %s184 = sphi 0, %s182
      %s185 = sphi 0, %s184
      %s199 = sphi 0, %s185
      %s207 = sphi 0, %s209
      %s210 = sphi 0, %s207
      %s211 = sphi 0, %s210
      %s227 = sphi 0, %s211
    $region4: #{tpu_custom_call.1} parent=1 // loop_header_branch
      %25 = sbr.rel (%p23) target = $region8
    $region5: #{tpu_custom_call.1} parent=1 // loop_body
      %s27 = ssub.s32 %s22, 1
      %s28 = ssub.s32 %s22, 2
      %s35 = sadd.s32 1, %s30
      %p36 = scmp.ge.s32.totalorder %s35, 1
      %s37 = scalar_select %p36, 0, %s35
      %s38 = sadd.s32 1, %s29
      %s39 = scalar_select %p36, %s38, %s29
      %p40 = scmp.ge.s32.totalorder %s39, 2
      %s41 = scalar_select %p40, 0, %s39
      %s42 = ssub.s32 %s29, %s41
      %s43 = ssub.s32 %s30, %s37
      %s44 = sor.u32 %s42, %s43
      %p45 = scmp.eq.s32.totalorder %s44, 0
      %s47 = sadd.s32 %s46, 1
      %s48 = scalar_select %p45, %s46, %s47
      %p51 = pneg %p45
      %p52 = scmp.eq.s32.totalorder %s22, 1
      %p53 = por %p51, %p52
      %p54 = scmp.ne.s32.totalorder %s46, %s49
      %p55 = scmp.eq.s32.totalorder %s22, 0
      %p56 = por %p54, %p55
      %p57 = scmp.ne.s32.totalorder %s46, %s49
      %p58 = scmp.eq.s32.totalorder %s27, 1
      %p59 = por %p57, %p58
      %p60 = scmp.ne.s32.totalorder %s49, %s50
      %p61 = scmp.eq.s32.totalorder %s27, 0
      %p62 = por %p60, %p61
      %p63 = scmp.ne.s32.totalorder %s49, %s50
      %p64 = scmp.eq.s32.totalorder %s28, 1
      %p65 = por %p63, %p64
      %p67 = scmp.ne.s32.totalorder %s50, %s66
      %p68 = scmp.eq.s32.totalorder %s28, 0
      %p69 = por %p67, %p68
      %s70 = ssub.s32 %s29, %s41
      %s71 = ssub.s32 %s30, %s37
      %s72 = sor.u32 %s70, %s71
      %p73 = scmp.eq.s32.totalorder %s72, 0
      %s75 = sadd.s32 %s74, 1
      %s76 = scalar_select %p73, %s74, %s75
      %p79 = pneg %p73
      %p80 = scmp.eq.s32.totalorder %s22, 1
      %p81 = por %p79, %p80
      %p82 = scmp.ne.s32.totalorder %s74, %s77
      %p83 = scmp.eq.s32.totalorder %s22, 0
      %p84 = por %p82, %p83
      %p85 = scmp.ne.s32.totalorder %s74, %s77
      %p86 = scmp.eq.s32.totalorder %s27, 1
      %p87 = por %p85, %p86
      %p88 = scmp.ne.s32.totalorder %s77, %s78
      %p89 = scmp.eq.s32.totalorder %s27, 0
      %p90 = por %p88, %p89
      %p91 = scmp.ne.s32.totalorder %s77, %s78
      %p92 = scmp.eq.s32.totalorder %s28, 1
      %p93 = por %p91, %p92
      %p95 = scmp.ne.s32.totalorder %s78, %s94
      %p96 = scmp.eq.s32.totalorder %s28, 0
      %p97 = por %p95, %p96
      %s99 = sadd.s32 %s98, 1
      %p102 = scmp.eq.s32.totalorder %s22, 1
      %p103 = scmp.ne.s32.totalorder %s98, %s100
      %p104 = scmp.eq.s32.totalorder %s22, 0
      %p105 = por %p103, %p104
      %p106 = scmp.ne.s32.totalorder %s98, %s100
      %p107 = scmp.eq.s32.totalorder %s27, 1
      %p108 = por %p106, %p107
      %p109 = scmp.ne.s32.totalorder %s100, %s101
      %p110 = scmp.eq.s32.totalorder %s27, 0
      %p111 = por %p109, %p110
      %p112 = scmp.ne.s32.totalorder %s100, %s101
      %p113 = scmp.eq.s32.totalorder %s28, 1
      %p114 = por %p112, %p113
      %p116 = scmp.ne.s32.totalorder %s101, %s115
      %p117 = scmp.eq.s32.totalorder %s28, 0
      %p118 = por %p116, %p117
      %s120 = sadd.s32 %s119, 1
      %p123 = scmp.eq.s32.totalorder %s22, 1
      %p124 = scmp.ne.s32.totalorder %s119, %s121
      %p125 = scmp.eq.s32.totalorder %s22, 0
      %p126 = por %p124, %p125
      %p127 = scmp.ne.s32.totalorder %s119, %s121
      %p128 = scmp.eq.s32.totalorder %s27, 1
      %p129 = por %p127, %p128
      %p130 = scmp.ne.s32.totalorder %s121, %s122
      %p131 = scmp.eq.s32.totalorder %s27, 0
      %p132 = por %p130, %p131
      %p133 = scmp.ne.s32.totalorder %s121, %s122
      %p134 = scmp.eq.s32.totalorder %s28, 1
      %p135 = por %p133, %p134
      %p137 = scmp.ne.s32.totalorder %s122, %s136
      %p138 = scmp.eq.s32.totalorder %s28, 0
      %p139 = por %p137, %p138
      %s141 = sadd.s32 %s140, 1
      %p144 = scmp.eq.s32.totalorder %s22, 1
      %p145 = scmp.ne.s32.totalorder %s140, %s142
      %p146 = scmp.eq.s32.totalorder %s22, 0
      %p147 = por %p145, %p146
      %p148 = scmp.ne.s32.totalorder %s140, %s142
      %p149 = scmp.eq.s32.totalorder %s27, 1
      %p150 = por %p148, %p149
      %p151 = scmp.ne.s32.totalorder %s142, %s143
      %p152 = scmp.eq.s32.totalorder %s27, 0
      %p153 = por %p151, %p152
      %p154 = scmp.ne.s32.totalorder %s142, %s143
      %p155 = scmp.eq.s32.totalorder %s28, 1
      %p156 = por %p154, %p155
      %p158 = scmp.ne.s32.totalorder %s143, %s157
      %p159 = scmp.eq.s32.totalorder %s28, 0
      %p160 = por %p158, %p159
      %s162 = sadd.s32 %s161, 1
      %p165 = scmp.eq.s32.totalorder %s22, 1
      %p166 = scmp.ne.s32.totalorder %s161, %s163
      %p167 = scmp.eq.s32.totalorder %s22, 0
      %p168 = por %p166, %p167
      %p169 = scmp.ne.s32.totalorder %s161, %s163
      %p170 = scmp.eq.s32.totalorder %s27, 1
      %p171 = por %p169, %p170
      %p172 = scmp.ne.s32.totalorder %s163, %s164
      %p173 = scmp.eq.s32.totalorder %s27, 0
      %p174 = por %p172, %p173
      %p175 = scmp.ne.s32.totalorder %s163, %s164
      %p176 = scmp.eq.s32.totalorder %s28, 1
      %p177 = por %p175, %p176
      %p179 = scmp.ne.s32.totalorder %s164, %s178
      %p180 = scmp.eq.s32.totalorder %s28, 0
      %p181 = por %p179, %p180
      %s183 = sadd.s32 %s182, 1
      %p186 = scmp.eq.s32.totalorder %s22, 1
      %p187 = scmp.ne.s32.totalorder %s182, %s184
      %p188 = scmp.eq.s32.totalorder %s22, 0
      %p189 = por %p187, %p188
      %p190 = scmp.ne.s32.totalorder %s182, %s184
      %p191 = scmp.eq.s32.totalorder %s27, 1
      %p192 = por %p190, %p191
      %p193 = scmp.ne.s32.totalorder %s184, %s185
      %p194 = scmp.eq.s32.totalorder %s27, 0
      %p195 = por %p193, %p194
      %p196 = scmp.ne.s32.totalorder %s184, %s185
      %p197 = scmp.eq.s32.totalorder %s28, 1
      %p198 = por %p196, %p197
      %p200 = scmp.ne.s32.totalorder %s185, %s199
      %p201 = scmp.eq.s32.totalorder %s28, 0
      %p202 = por %p200, %p201
      %s203 = ssub.s32 %s29, %s41
      %s204 = ssub.s32 %s30, %s37
      %s205 = sor.u32 %s203, %s204
      %p206 = scmp.eq.s32.totalorder %s205, 0
      %s208 = sadd.s32 %s207, 1
      %s209 = scalar_select %p206, %s207, %s208
      %p212 = pneg %p206
      %p213 = scmp.eq.s32.totalorder %s22, 1
      %p214 = por %p212, %p213
      %p215 = scmp.ne.s32.totalorder %s207, %s210
      %p216 = scmp.eq.s32.totalorder %s22, 0
      %p217 = por %p215, %p216
      %p218 = scmp.ne.s32.totalorder %s207, %s210
      %p219 = scmp.eq.s32.totalorder %s27, 1
      %p220 = por %p218, %p219
      %p221 = scmp.ne.s32.totalorder %s210, %s211
      %p222 = scmp.eq.s32.totalorder %s27, 0
      %p223 = por %p221, %p222
      %p224 = scmp.ne.s32.totalorder %s210, %s211
      %p225 = scmp.eq.s32.totalorder %s28, 1
      %p226 = por %p224, %p225
      %p228 = scmp.ne.s32.totalorder %s211, %s227
      %p229 = scmp.eq.s32.totalorder %s28, 0
      %p230 = por %p228, %p229
      %p231 = scmp.le.s32.totalorder 1, %s22
      %p232 = scmp.lt.s32.totalorder %s22, 3
      %p233 = pnand %p231, %p232
      %p234 = pneg %p233
      // Predicated region
      $region9: #{tpu_custom_call.1} parent=5 // pred_check
        _
      $region10: #{tpu_custom_call.1} parent=5 // pred_check_branch
        %236 = sbr.rel (%p233) target = $region12
      $region11: #{tpu_custom_call.1} parent=5 // pred_region
        %s237 = ssub.s32 %s22, 1
        // Predicated region
        $region13: #{tpu_custom_call.1} parent=11 // pred_check
          %p238 = pneg %p111
        $region14: #{tpu_custom_call.1} parent=11 // pred_check_branch
          %240 = sbr.rel (%p238) target = $region16
        $region15: #{tpu_custom_call.1} parent=11 // pred_region
          _
        $region16: #{tpu_custom_call.1} parent=11 // pred_fallthru
          _
        // Predicated region
        $region17: #{tpu_custom_call.1} parent=11 // pred_check
          %p241 = pneg %p132
        $region18: #{tpu_custom_call.1} parent=11 // pred_check_branch
          %243 = sbr.rel (%p241) target = $region20
        $region19: #{tpu_custom_call.1} parent=11 // pred_region
          _
        $region20: #{tpu_custom_call.1} parent=11 // pred_fallthru
          _
        // Predicated region
        $region21: #{tpu_custom_call.1} parent=11 // pred_check
          %p244 = pneg %p153
        $region22: #{tpu_custom_call.1} parent=11 // pred_check_branch
          %246 = sbr.rel (%p244) target = $region24
        $region23: #{tpu_custom_call.1} parent=11 // pred_region
          _
        $region24: #{tpu_custom_call.1} parent=11 // pred_fallthru
          _
        // Predicated region
        $region25: #{tpu_custom_call.1} parent=11 // pred_check
          %p247 = pneg %p174
        $region26: #{tpu_custom_call.1} parent=11 // pred_check_branch
          %249 = sbr.rel (%p247) target = $region28
        $region27: #{tpu_custom_call.1} parent=11 // pred_region
          _
        $region28: #{tpu_custom_call.1} parent=11 // pred_fallthru
          _
        // Predicated region
        $region29: #{tpu_custom_call.1} parent=11 // pred_check
          %p250 = pneg %p195
        $region30: #{tpu_custom_call.1} parent=11 // pred_check_branch
          %252 = sbr.rel (%p250) target = $region32
        $region31: #{tpu_custom_call.1} parent=11 // pred_region
          _
        $region32: #{tpu_custom_call.1} parent=11 // pred_fallthru
          _
      $region12: #{tpu_custom_call.1} parent=5 // pred_fallthru
        _
      %p253 = scmp.lt.s32.totalorder %s22, 2
      // Predicated region
      $region33: #{tpu_custom_call.1} parent=5 // pred_check
        %p254 = pneg %p253
      $region34: #{tpu_custom_call.1} parent=5 // pred_check_branch
        %256 = sbr.rel (%p254) target = $region36
      $region35: #{tpu_custom_call.1} parent=5 // pred_region
        // Predicated region
        $region37: #{tpu_custom_call.1} parent=35 // pred_check
          %p257 = pneg %p56
        $region38: #{tpu_custom_call.1} parent=35 // pred_check_branch
          %259 = sbr.rel (%p257) target = $region40
        $region39: #{tpu_custom_call.1} parent=35 // pred_region
          %s260 = sand.u32 %s46, 1
          %s261 = scalar_lea.sflag [#allocation3], %s260
          %s262 = sand.u32 %s46, 1
          %s263 = smul.addr %s262, 8
          %s264 = scalar_lea.vmem [#allocation2], %s263
          %s265 = smul.u32 2, %s30
          %s267 = ssub.s32 128, 128
          %268 = vsyncadd %s261, %s267
          %s269 = smul.addr %s29, 2
          %s270 = sadd.s32 %s265, %s269
          %s271 = smul.addr %s270, 64
          %s272 = scalar_lea.hbm %s0, %s271
          %s274 = sshll.u32 %s264, 4
          %s275 = int_to_ptr.vmem [resolvable:$true] %s274
          %277 = dma.hbm_to_vmem [thread:$0]  %s272, 128, %s275, %s261
        $region40: #{tpu_custom_call.1} parent=35 // pred_fallthru
          _
        // Predicated region
        $region41: #{tpu_custom_call.1} parent=35 // pred_check
          %p278 = pneg %p84
        $region42: #{tpu_custom_call.1} parent=35 // pred_check_branch
          %280 = sbr.rel (%p278) target = $region44
        $region43: #{tpu_custom_call.1} parent=35 // pred_region
          %s281 = sand.u32 %s74, 1
          %s282 = scalar_lea.sflag [#allocation6], %s281
          %s283 = sand.u32 %s74, 1
          %s284 = smul.addr %s283, 8
          %s285 = scalar_lea.vmem [#allocation5], %s284
          %s286 = smul.u32 2, %s30
          %s288 = ssub.s32 128, 128
          %289 = vsyncadd %s282, %s288
          %s290 = smul.addr %s29, 2
          %s291 = sadd.s32 %s286, %s290
          %s292 = smul.addr %s291, 64
          %s293 = scalar_lea.hbm %s1, %s292
          %s295 = sshll.u32 %s285, 4
          %s296 = int_to_ptr.vmem [resolvable:$true] %s295
          %298 = dma.hbm_to_vmem [thread:$0]  %s293, 128, %s296, %s282
        $region44: #{tpu_custom_call.1} parent=35 // pred_fallthru
          _
      $region36: #{tpu_custom_call.1} parent=5 // pred_fallthru
        _
      %p299 = scmp.le.s32.totalorder 1, %s22
      %p300 = scmp.lt.s32.totalorder %s22, 3
      %p301 = pnand %p299, %p300
      %p302 = pneg %p301
      // Predicated region
      $region45: #{tpu_custom_call.1} parent=5 // pred_check
        _
      $region46: #{tpu_custom_call.1} parent=5 // pred_check_branch
        %304 = sbr.rel (%p301) target = $region48
      $region47: #{tpu_custom_call.1} parent=5 // pred_region
        %s305 = ssub.s32 %s22, 1
        %s306 = sand.u32 %s49, 1
        %s307 = scalar_lea.sflag [#allocation3], %s306
        %s308 = sand.u32 %s49, 1
        %s309 = smul.addr %s308, 8
        %s310 = scalar_lea.vmem [#allocation2], %s309
        // Predicated region
        $region49: #{tpu_custom_call.1} parent=47 // pred_check
          %p311 = pneg %p62
        $region50: #{tpu_custom_call.1} parent=47 // pred_check_branch
          %313 = sbr.rel (%p311) target = $region52
        $region51: #{tpu_custom_call.1} parent=47 // pred_region
          %314 = dma.done %s307, 128
        $region52: #{tpu_custom_call.1} parent=47 // pred_fallthru
          _
        %s315 = sand.u32 %s77, 1
        %s316 = scalar_lea.sflag [#allocation6], %s315
        %s317 = sand.u32 %s77, 1
        %s318 = smul.addr %s317, 8
        %s319 = scalar_lea.vmem [#allocation5], %s318
        // Predicated region
        $region53: #{tpu_custom_call.1} parent=47 // pred_check
          %p320 = pneg %p90
        $region54: #{tpu_custom_call.1} parent=47 // pred_check_branch
          %322 = sbr.rel (%p320) target = $region56
        $region55: #{tpu_custom_call.1} parent=47 // pred_region
          %323 = dma.done %s316, 128
        $region56: #{tpu_custom_call.1} parent=47 // pred_fallthru
          _
        %s324 = sand.u32 %s49, 1
        %s325 = scalar_lea.sflag [#allocation3], %s324
        %s326 = sand.u32 %s49, 1
        %s327 = smul.addr %s326, 8
        %s328 = scalar_lea.vmem [#allocation2], %s327
        %p329 = pneg %p62
        %p330 = pneg %p59
        %s331 = sand.u32 %s77, 1
        %s332 = scalar_lea.sflag [#allocation6], %s331
        %s333 = sand.u32 %s77, 1
        %s334 = smul.addr %s333, 8
        %s335 = scalar_lea.vmem [#allocation5], %s334
        %p336 = pneg %p90
        %p337 = pneg %p87
        %p338 = pneg %p111
        %p339 = pneg %p108
        %p340 = pneg %p132
        %p341 = pneg %p129
        %p342 = pneg %p153
        %p343 = pneg %p150
        %p344 = pneg %p174
        %p345 = pneg %p171
        %p346 = pneg %p195
        %p347 = pneg %p192
        %p348 = pneg %p223
        %p349 = pneg %p220
        %s350 = sand.u32 %s210, 1
        %s351 = scalar_lea.sflag [#allocation4], %s350
        %s352 = sand.u32 %s210, 1
        %s353 = smul.addr %s352, 8
        %s354 = scalar_lea.vmem [#allocation7], %s353
        %s355 = smul.u32 2, %s32
        %s356 = smul.u32 2, %s32
        %s357 = smul.u32 2, %s32
        %v358 = vld [vmem:[%s310] sm:$0xff]
        %v359 = vld [vmem:[%s319] sm:$0xff]
        %v360 = vld [vmem:[%s2] sm:$0xf]
        %v361 = vld [vmem:[%s3] sm:$0xf]
        %v362 = vld [vmem:[%s4] sm:$0xf]
        %v363 = vld [vmem:[%s5] sm:$0xf]
        %v364 = vld [vmem:[%s6] sm:$0xf]
        %366 = vset.pattern.permute.xlu0 0
        %367 = vperm.xlu0 %366, %v360
        %v368 = vpop.permute.xlu0 %367
        %v371 = vlaneseq
        %v372 = vshrl.u32 %v371, 7
        %v373 = vsub.s32 0, %v372
        %v374 = vrot.slane %v359, %v373
        %v375 = vlaneseq
        %v376 = vshrl.u32 %v375, 7
        %v377 = vsub.s32 4, %v376
        %v378 = vrot.slane %v359, %v377
        %v381 = vlaneseq
        %v382 = vshrl.u32 %v381, 7
        %v383 = vsub.s32 0, %v382
        %v384 = vrot.slane %v374, %v383
        %v385 = vlaneseq
        %v386 = vshrl.u32 %v385, 7
        %v387 = vsub.s32 0, %v386
        %v388 = vrot.slane %v378, %v387
        %v389 = vmul.f32 %v368, %v384
        %v390 = vmul.f32 %v368, %v388
        %391 = vset.pattern.permute.xlu0 1
        %392 = vperm.xlu0 %391, %v360
        %v393 = vpop.permute.xlu0 %392
        %v395 = vlaneseq
        %v396 = vshrl.u32 %v395, 7
        %v397 = vsub.s32 1, %v396
        %v398 = vrot.slane %v359, %v397
        %v399 = vlaneseq
        %v400 = vshrl.u32 %v399, 7
        %v401 = vsub.s32 5, %v400
        %v402 = vrot.slane %v359, %v401
        %v405 = vlaneseq
        %v406 = vshrl.u32 %v405, 7
        %v407 = vsub.s32 1, %v406
        %v408 = vrot.slane %v398, %v407
        %v409 = vlaneseq
        %v410 = vshrl.u32 %v409, 7
        %v411 = vsub.s32 1, %v410
        %v412 = vrot.slane %v402, %v411
        %v413 = vmul.f32 %v393, %v408
        %v414 = vmul.f32 %v393, %v412
        %v415 = vadd.f32 %v389, %v413
        %v416 = vadd.f32 %v390, %v414
        %417 = vset.pattern.permute.xlu0 2
        %418 = vperm.xlu0 %417, %v360
        %v419 = vpop.permute.xlu0 %418
        %v421 = vlaneseq
        %v422 = vshrl.u32 %v421, 7
        %v423 = vsub.s32 2, %v422
        %v424 = vrot.slane %v359, %v423
        %v425 = vlaneseq
        %v426 = vshrl.u32 %v425, 7
        %v427 = vsub.s32 6, %v426
        %v428 = vrot.slane %v359, %v427
        %v431 = vlaneseq
        %v432 = vshrl.u32 %v431, 7
        %v433 = vsub.s32 2, %v432
        %v434 = vrot.slane %v424, %v433
        %v435 = vlaneseq
        %v436 = vshrl.u32 %v435, 7
        %v437 = vsub.s32 2, %v436
        %v438 = vrot.slane %v428, %v437
        %v439 = vmul.f32 %v419, %v434
        %v440 = vmul.f32 %v419, %v438
        %v441 = vadd.f32 %v415, %v439
        %v442 = vadd.f32 %v416, %v440
        %443 = vset.pattern.permute.xlu0 3
        %444 = vperm.xlu0 %443, %v360
        %v445 = vpop.permute.xlu0 %444
        %v447 = vlaneseq
        %v448 = vshrl.u32 %v447, 7
        %v449 = vsub.s32 3, %v448
        %v450 = vrot.slane %v359, %v449
        %v451 = vlaneseq
        %v452 = vshrl.u32 %v451, 7
        %v453 = vsub.s32 7, %v452
        %v454 = vrot.slane %v359, %v453
        %v457 = vlaneseq
        %v458 = vshrl.u32 %v457, 7
        %v459 = vsub.s32 3, %v458
        %v460 = vrot.slane %v450, %v459
        %v461 = vlaneseq
        %v462 = vshrl.u32 %v461, 7
        %v463 = vsub.s32 3, %v462
        %v464 = vrot.slane %v454, %v463
        %v465 = vmul.f32 %v445, %v460
        %v466 = vmul.f32 %v445, %v464
        %v467 = vadd.f32 %v441, %v465
        %v468 = vadd.f32 %v442, %v466
        %470 = vset.pattern.permute.xlu0 0
        %471 = vperm.xlu0 %470, %v361
        %v472 = vpop.permute.xlu0 %471
        %v474 = vadd.f32 %v467, %v472
        %v475 = vadd.f32 %v468, %v472
        %v476 = vxor.u32 %v474, 2147483648
        %v477 = vxor.u32 %v475, 2147483648
        %v478 = vmul.f32 %v476, 1.442695
        %v479 = vpow.pop %v478
        %v480 = vmul.f32 %v477, 1.442695
        %v481 = vpow.pop %v480
        %v482 = vadd.f32 %v479, 1.0
        %v483 = vadd.f32 %v481, 1.0
        %v484 = vrcp.pop %v482
        %v485 = vmul.f32 1.0, %v484
        %v486 = vrcp.pop %v483
        %v487 = vmul.f32 1.0, %v486
        %v489 = vcombine.high %v358, %v358
        %v491 = vmul.f32 %v485, %v358
        %v492 = vmul.f32 %v487, %v489
        %494 = vset.pattern.permute.xlu0 0
        %495 = vperm.xlu0 %494, %v362
        %v496 = vpop.permute.xlu0 %495
        %v498 = vlaneseq
        %v499 = vshrl.u32 %v498, 7
        %v500 = vsub.s32 0, %v499
        %v501 = vrot.slane %v358, %v500
        %v502 = vlaneseq
        %v503 = vshrl.u32 %v502, 7
        %v504 = vsub.s32 4, %v503
        %v505 = vrot.slane %v358, %v504
        %v508 = vlaneseq
        %v509 = vshrl.u32 %v508, 7
        %v510 = vsub.s32 0, %v509
        %v511 = vrot.slane %v501, %v510
        %v512 = vlaneseq
        %v513 = vshrl.u32 %v512, 7
        %v514 = vsub.s32 0, %v513
        %v515 = vrot.slane %v505, %v514
        %v516 = vmul.f32 %v496, %v511
        %v517 = vmul.f32 %v496, %v515
        %518 = vset.pattern.permute.xlu0 1
        %519 = vperm.xlu0 %518, %v362
        %v520 = vpop.permute.xlu0 %519
        %v522 = vlaneseq
        %v523 = vshrl.u32 %v522, 7
        %v524 = vsub.s32 1, %v523
        %v525 = vrot.slane %v358, %v524
        %v526 = vlaneseq
        %v527 = vshrl.u32 %v526, 7
        %v528 = vsub.s32 5, %v527
        %v529 = vrot.slane %v358, %v528
        %v532 = vlaneseq
        %v533 = vshrl.u32 %v532, 7
        %v534 = vsub.s32 1, %v533
        %v535 = vrot.slane %v525, %v534
        %v536 = vlaneseq
        %v537 = vshrl.u32 %v536, 7
        %v538 = vsub.s32 1, %v537
        %v539 = vrot.slane %v529, %v538
        %v540 = vmul.f32 %v520, %v535
        %v541 = vmul.f32 %v520, %v539
        %v542 = vadd.f32 %v516, %v540
        %v543 = vadd.f32 %v517, %v541
        %544 = vset.pattern.permute.xlu0 2
        %545 = vperm.xlu0 %544, %v362
        %v546 = vpop.permute.xlu0 %545
        %v548 = vlaneseq
        %v549 = vshrl.u32 %v548, 7
        %v550 = vsub.s32 2, %v549
        %v551 = vrot.slane %v358, %v550
        %v552 = vlaneseq
        %v553 = vshrl.u32 %v552, 7
        %v554 = vsub.s32 6, %v553
        %v555 = vrot.slane %v358, %v554
        %v558 = vlaneseq
        %v559 = vshrl.u32 %v558, 7
        %v560 = vsub.s32 2, %v559
        %v561 = vrot.slane %v551, %v560
        %v562 = vlaneseq
        %v563 = vshrl.u32 %v562, 7
        %v564 = vsub.s32 2, %v563
        %v565 = vrot.slane %v555, %v564
        %v566 = vmul.f32 %v546, %v561
        %v567 = vmul.f32 %v546, %v565
        %v568 = vadd.f32 %v542, %v566
        %v569 = vadd.f32 %v543, %v567
        %570 = vset.pattern.permute.xlu0 3
        %571 = vperm.xlu0 %570, %v362
        %v572 = vpop.permute.xlu0 %571
        %v574 = vlaneseq
        %v575 = vshrl.u32 %v574, 7
        %v576 = vsub.s32 3, %v575
        %v577 = vrot.slane %v358, %v576
        %v578 = vlaneseq
        %v579 = vshrl.u32 %v578, 7
        %v580 = vsub.s32 7, %v579
        %v581 = vrot.slane %v358, %v580
        %v584 = vlaneseq
        %v585 = vshrl.u32 %v584, 7
        %v586 = vsub.s32 3, %v585
        %v587 = vrot.slane %v577, %v586
        %v588 = vlaneseq
        %v589 = vshrl.u32 %v588, 7
        %v590 = vsub.s32 3, %v589
        %v591 = vrot.slane %v581, %v590
        %v592 = vmul.f32 %v572, %v587
        %v593 = vmul.f32 %v572, %v591
        %v594 = vadd.f32 %v568, %v592
        %v595 = vadd.f32 %v569, %v593
        %597 = vset.pattern.permute.xlu0 0
        %598 = vperm.xlu0 %597, %v363
        %v599 = vpop.permute.xlu0 %598
        %v601 = vlaneseq
        %v602 = vshrl.u32 %v601, 7
        %v603 = vsub.s32 0, %v602
        %v604 = vrot.slane %v491, %v603
        %v605 = vlaneseq
        %v606 = vshrl.u32 %v605, 7
        %v607 = vsub.s32 0, %v606
        %v608 = vrot.slane %v492, %v607
        %v609 = vmul.f32 %v599, %v604
        %v610 = vmul.f32 %v599, %v608
        %611 = vset.pattern.permute.xlu0 1
        %612 = vperm.xlu0 %611, %v363
        %v613 = vpop.permute.xlu0 %612
        %v615 = vlaneseq
        %v616 = vshrl.u32 %v615, 7
        %v617 = vsub.s32 1, %v616
        %v618 = vrot.slane %v491, %v617
        %v619 = vlaneseq
        %v620 = vshrl.u32 %v619, 7
        %v621 = vsub.s32 1, %v620
        %v622 = vrot.slane %v492, %v621
        %v623 = vmul.f32 %v613, %v618
        %v624 = vmul.f32 %v613, %v622
        %v625 = vadd.f32 %v609, %v623
        %v626 = vadd.f32 %v610, %v624
        %627 = vset.pattern.permute.xlu0 2
        %628 = vperm.xlu0 %627, %v363
        %v629 = vpop.permute.xlu0 %628
        %v631 = vlaneseq
        %v632 = vshrl.u32 %v631, 7
        %v633 = vsub.s32 2, %v632
        %v634 = vrot.slane %v491, %v633
        %v635 = vlaneseq
        %v636 = vshrl.u32 %v635, 7
        %v637 = vsub.s32 2, %v636
        %v638 = vrot.slane %v492, %v637
        %v639 = vmul.f32 %v629, %v634
        %v640 = vmul.f32 %v629, %v638
        %v641 = vadd.f32 %v625, %v639
        %v642 = vadd.f32 %v626, %v640
        %643 = vset.pattern.permute.xlu0 3
        %644 = vperm.xlu0 %643, %v363
        %v645 = vpop.permute.xlu0 %644
        %v647 = vlaneseq
        %v648 = vshrl.u32 %v647, 7
        %v649 = vsub.s32 3, %v648
        %v650 = vrot.slane %v491, %v649
        %v651 = vlaneseq
        %v652 = vshrl.u32 %v651, 7
        %v653 = vsub.s32 3, %v652
        %v654 = vrot.slane %v492, %v653
        %v655 = vmul.f32 %v645, %v650
        %v656 = vmul.f32 %v645, %v654
        %v657 = vadd.f32 %v641, %v655
        %v658 = vadd.f32 %v642, %v656
        %v659 = vadd.f32 %v594, %v657
        %v660 = vadd.f32 %v595, %v658
        %662 = vset.pattern.permute.xlu0 0
        %663 = vperm.xlu0 %662, %v364
        %v664 = vpop.permute.xlu0 %663
        %v666 = vadd.f32 %v659, %v664
        %v667 = vadd.f32 %v660, %v664
        %v670 = vcombine.low %v666, %v667
        %672 = vst [vmem:[%s354] sm:$0xff] %v670
        %s673 = sand.u32 %s210, 1
        %s674 = scalar_lea.sflag [#allocation4], %s673
        %s675 = sand.u32 %s210, 1
        %s676 = smul.addr %s675, 8
        %s677 = scalar_lea.vmem [#allocation7], %s676
        // Predicated region
        $region57: #{tpu_custom_call.1} parent=47 // pred_check
          %p678 = pneg %p220
        $region58: #{tpu_custom_call.1} parent=47 // pred_check_branch
          %680 = sbr.rel (%p678) target = $region60
        $region59: #{tpu_custom_call.1} parent=47 // pred_region
          %s681 = smul.u32 2, %s32
          %s683 = ssub.s32 128, 128
          %684 = vsyncadd %s674, %s683
          %s685 = smul.addr %s31, 2
          %s686 = sadd.s32 %s681, %s685
          %s687 = smul.addr %s686, 64
          %s688 = scalar_lea.hbm %s7, %s687
          %s690 = sshll.u32 %s677, 4
          %s691 = int_to_ptr.vmem [resolvable:$true] %s690
          %693 = dma.vmem_to_hbm [thread:$0]  %s691, 128, %s688, %s674
        $region60: #{tpu_custom_call.1} parent=47 // pred_fallthru
          _
      $region48: #{tpu_custom_call.1} parent=5 // pred_fallthru
        _
      %p694 = scmp.le.s32.totalorder 2, %s22
      // Predicated region
      $region61: #{tpu_custom_call.1} parent=5 // pred_check
        %p695 = pneg %p694
      $region62: #{tpu_custom_call.1} parent=5 // pred_check_branch
        %697 = sbr.rel (%p695) target = $region64
      $region63: #{tpu_custom_call.1} parent=5 // pred_region
        %s698 = ssub.s32 %s22, 2
        // Predicated region
        $region65: #{tpu_custom_call.1} parent=63 // pred_check
          %p699 = pneg %p226
        $region66: #{tpu_custom_call.1} parent=63 // pred_check_branch
          %701 = sbr.rel (%p699) target = $region68
        $region67: #{tpu_custom_call.1} parent=63 // pred_region
          %s702 = sand.u32 %s211, 1
          %s703 = scalar_lea.sflag [#allocation4], %s702
          %s704 = sand.u32 %s211, 1
          %s705 = smul.addr %s704, 8
          %s706 = scalar_lea.vmem [#allocation7], %s705
          %707 = dma.done %s703, 128
        $region68: #{tpu_custom_call.1} parent=63 // pred_fallthru
          _
      $region64: #{tpu_custom_call.1} parent=5 // pred_fallthru
        _
    $region6: #{tpu_custom_call.1} parent=1 // loop_footer
      %s26 = sadd.s32 1, %s22
    $region7: #{tpu_custom_call.1} parent=1 // loop_footer_branch
      %21 = sbr.rel target = $region3
    $region8: #{tpu_custom_call.1} parent=1 // loop_exit
      _
    %708 = vsyncpa [#allocation3], 1
    %s709 = scalar_lea.sflag [#allocation3], 1
    %710 = vsyncpa %s709, 1
    %711 = vsyncpa [#allocation6], 1
    %s712 = scalar_lea.sflag [#allocation6], 1
    %713 = vsyncpa %s712, 1
    %714 = vsyncpa [#allocation4], 1
    %s715 = scalar_lea.sflag [#allocation4], 1
    %716 = vsyncpa %s715, 1

</llo_original>
